<compile_context>
chip_gen: v5e
topology: v5e:2x2
jax: 0.10.0
libtpu: 0.0.40
codegen_flags: <defaults>
</compile_context>

<pallas_src>
import functools

import jax
import jax.numpy as jnp
from jax.experimental import pallas as pl
from jax.experimental.pallas import tpu as pltpu


# Scoped-VMEM budget: safe on v5e/v6e (128 MiB phys) and v7x (64 MiB phys).
_VMEM_LIMIT = 48 * 1024 * 1024


def _round_up(x, m):
    return ((x + m - 1) // m) * m


def _pick_tile(dim, preferred, align):
    """Largest multiple of `align` that divides `dim` and is <= `preferred`; else full dim."""
    t = min(dim, preferred)
    t = (t // align) * align
    while t >= align:
        if dim % t == 0:
            return t
        t -= align
    return dim


# ---------------------------------------------------------------------------
# Kernel 1: fused 2-layer MLP   rel = ReLU(x @ W1 + b1) @ W2 + b2
#   grid = (M // tm, K // tk); the hidden activation is accumulated in a VMEM
#   f32 scratch across the K axis, then the second matmul runs with W2 resident.
# ---------------------------------------------------------------------------
def _fused_mlp_kernel(x_ref, w1_ref, b1_ref, w2_ref, b2_ref, o_ref, h_ref):
    k = pl.program_id(1)

    @pl.when(k == 0)
    def _():
        h_ref[...] = jnp.zeros_like(h_ref)

    # bf16 x bf16 -> f32 accumulation (native MXU fast path).
    h_ref[...] += jnp.dot(
        x_ref[...], w1_ref[...], preferred_element_type=jnp.float32
    )

    @pl.when(k == pl.num_programs(1) - 1)
    def _():
        h = jnp.maximum(h_ref[...] + b1_ref[...].astype(jnp.float32), 0.0)
        y = jnp.dot(
            h.astype(w2_ref.dtype), w2_ref[...], preferred_element_type=jnp.float32
        )
        o_ref[...] = (y + b2_ref[...].astype(jnp.float32)).astype(o_ref.dtype)


def pallas_fused_mlp(x, w1, b1, w2, b2, out_dtype):
    """rel = ReLU(x @ w1 + b1) @ w2 + b2.   x: (M, K) bf16, w1: (K, H) bf16, w2: (H, F) bf16."""
    m, k_dim = x.shape
    _, hdim = w1.shape
    _, f = w2.shape
    tm = _pick_tile(m, 256, 8)
    tk = _pick_tile(k_dim, 1024, 128)
    grid = (m // tm, k_dim // tk)

    return pl.pallas_call(
        _fused_mlp_kernel,
        out_shape=jax.ShapeDtypeStruct((m, f), out_dtype),
        grid=grid,
        in_specs=[
            pl.BlockSpec((tm, tk), lambda i, k: (i, k)),       # x tile
            pl.BlockSpec((tk, hdim), lambda i, k: (k, 0)),     # W1 K-slab
            pl.BlockSpec((1, hdim), lambda i, k: (0, 0)),      # b1 (resident)
            pl.BlockSpec((hdim, f), lambda i, k: (0, 0)),      # W2 (resident)
            pl.BlockSpec((1, f), lambda i, k: (0, 0)),         # b2 (resident)
        ],
        out_specs=pl.BlockSpec((tm, f), lambda i, k: (i, 0)),
        scratch_shapes=[pltpu.VMEM((tm, hdim), jnp.float32)],
        compiler_params=pltpu.CompilerParams(
            dimension_semantics=("parallel", "arbitrary"),
            vmem_limit_bytes=_VMEM_LIMIT,
        ),
    )(x, w1, b1.reshape(1, hdim), w2, b2.reshape(1, f))


# ---------------------------------------------------------------------------
# Kernel 2: scatter-mean via on-the-fly incidence matmul:
#   new = (obj + S @ rel) / (1 + rowsum(S)),  S[i, p] = 1 iff pairs[p, 0] == i.
#   S tiles are constructed inside the kernel from int32 subject indices.
# ---------------------------------------------------------------------------
def _aggregate_kernel(sub_ref, rel_ref, obj_ref, o_ref, acc_ref, cnt_ref):
    i = pl.program_id(0)
    k = pl.program_id(1)
    tr = acc_ref.shape[0]
    tp = rel_ref.shape[0]

    @pl.when(k == 0)
    def _():
        acc_ref[...] = jnp.zeros_like(acc_ref)
        cnt_ref[...] = jnp.zeros_like(cnt_ref)

    # Build the S tile on the fly (VPU filler, co-issues under the MXU matmul).
    row_ids = jax.lax.broadcasted_iota(jnp.int32, (tr, tp), 0) + i * tr
    match = row_ids == sub_ref[...]                      # (tr, tp) bool
    s = match.astype(rel_ref.dtype)                      # bf16 {0,1} -> MXU fast path
    acc_ref[...] += jnp.dot(s, rel_ref[...], preferred_element_type=jnp.float32)
    cnt_ref[...] += jnp.sum(match.astype(jnp.float32), axis=1, keepdims=True)

    @pl.when(k == pl.num_programs(1) - 1)
    def _():
        inv = pl.reciprocal(cnt_ref[...] + 1.0, approx=True)   # EUP slot
        y = (obj_ref[...].astype(jnp.float32) + acc_ref[...]) * inv
        o_ref[...] = y.astype(o_ref.dtype)


def pallas_aggregate(sub_padded, rel_out, obj_padded):
    """sub: (P,) int32 (padded with -1), rel: (P, F) bf16, obj: (N, F) -> (N, F)."""
    n_pad, feat = obj_padded.shape
    p_pad = rel_out.shape[0]
    tr = _pick_tile(n_pad, 256, 8)
    tp = _pick_tile(p_pad, 1024, 128)
    grid = (n_pad // tr, p_pad // tp)

    return pl.pallas_call(
        _aggregate_kernel,
        out_shape=jax.ShapeDtypeStruct((n_pad, feat), obj_padded.dtype),
        grid=grid,
        in_specs=[
            pl.BlockSpec((1, tp), lambda i, k: (0, k)),        # subject indices
            pl.BlockSpec((tp, feat), lambda i, k: (k, 0)),     # rel_out slab
            pl.BlockSpec((tr, feat), lambda i, k: (i, 0)),     # obj feats
        ],
        out_specs=pl.BlockSpec((tr, feat), lambda i, k: (i, 0)),
        scratch_shapes=[
            pltpu.VMEM((tr, feat), jnp.float32),
            pltpu.VMEM((tr, 1), jnp.float32),
        ],
        compiler_params=pltpu.CompilerParams(
            dimension_semantics=("parallel", "arbitrary"),
            vmem_limit_bytes=_VMEM_LIMIT,
        ),
    )(sub_padded.reshape(1, p_pad), rel_out, obj_padded)


# ---------------------------------------------------------------------------
# Module forward
# ---------------------------------------------------------------------------
def position_relation_encode_unit(obj_feats, bboxes_embedding, pairs, params):
    """One PositionRelationEncodeUnit forward pass."""
    w1, b1, w2, b2 = params
    n_obj, _ = obj_feats.shape
    n_pairs = pairs.shape[0]

    pairs = pairs.astype(jnp.int32)
    sub_idx = pairs[:, 0]
    obj_idx = pairs[:, 1]

    # TODO(synk): the data-dependent gather/concat stays wrapper-side (layout plumbing);
    # fusing it into the MLP via PrefetchScalarGridSpec + pl.Element would force 1-row blocks.
    feats_sub = jnp.take(obj_feats, sub_idx, axis=0)                 # (P, F)
    feats_obj = jnp.take(obj_feats, obj_idx, axis=0)                 # (P, F)
    bbox_emb = bboxes_embedding[sub_idx, obj_idx]                    # (P, B)
    x = jnp.concatenate([feats_sub, feats_obj, bbox_emb], axis=1)    # (P, 2F+B)
    x = x.astype(jnp.bfloat16)

    # Pad pair rows to a multiple of 128 so tiles never degenerate.
    p_pad = max(_round_up(n_pairs, 128), 128)
    if p_pad != n_pairs:
        x = jnp.pad(x, ((0, p_pad - n_pairs), (0, 0)))

    # Fused 2-layer MLP (Linear -> ReLU -> Linear) on the MXU, bf16 operands / f32 acc.
    rel_out = pallas_fused_mlp(
        x,
        w1.astype(jnp.bfloat16), b1.astype(jnp.float32),
        w2.astype(jnp.bfloat16), b2.astype(jnp.float32),
        jnp.bfloat16,
    )                                                                # (Pp, F) bf16

    # Padded-pair subjects are -1 so they never match any object row.
    n_pad = max(_round_up(n_obj, 128), 128)
    sub_padded = jnp.concatenate(
        [sub_idx, jnp.full((p_pad - n_pairs,), -1, jnp.int32)], axis=0
    )
    obj_padded = obj_feats
    if n_pad != n_obj:
        obj_padded = jnp.pad(obj_feats, ((0, n_pad - n_obj), (0, 0)))

    new_feats = pallas_aggregate(sub_padded, rel_out, obj_padded)[:n_obj]
    return new_feats, bboxes_embedding, pairs


def position_relation_encode(obj_feats, bboxes_embedding, pairs, params, gconv_layers=1):
    for _ in range(gconv_layers):
        obj_feats, bboxes_embedding, pairs = position_relation_encode_unit(
            obj_feats, bboxes_embedding, pairs, params
        )
    return obj_feats


# Pure-JAX f32 reference for correctness checking.
def _reference_forward(obj_feats, bboxes_embedding, pairs, params, gconv_layers=1):
    w1, b1, w2, b2 = params
    feats = obj_feats
    for _ in range(gconv_layers):
        sub = pairs[:, 0]
        obj = pairs[:, 1]
        x = jnp.concatenate(
            [feats[sub], feats[obj], bboxes_embedding[sub, obj]], axis=1
        )
        h = jnp.maximum(x @ w1 + b1, 0.0)
        rel = h @ w2 + b2
        one_hot = (
            jnp.arange(feats.shape[0])[:, None] == sub[None, :]
        ).astype(feats.dtype)
        summed = feats + one_hot @ rel
        count = 1.0 + one_hot.sum(axis=1, keepdims=True)
        feats = summed / count
    return feats


if __name__ == "__main__":
    key = jax.random.PRNGKey(0)
    k_feat, k_box, k_pairs, k_w1, k_w2 = jax.random.split(key, 5)

    # Small shapes consistent with the module (real defaults are 2048/2048/2048).
    n_obj, n_pairs = 16, 20
    feat_dim, box_emb_dim, hidden_dim = 128, 128, 128
    in_dim = 2 * feat_dim + box_emb_dim

    obj_feats = jax.random.normal(k_feat, (n_obj, feat_dim), dtype=jnp.float32)
    bboxes_embedding = jax.random.normal(
        k_box, (n_obj, n_obj, box_emb_dim), dtype=jnp.float32
    )
    pairs = jax.random.randint(k_pairs, (n_pairs, 2), 0, n_obj, dtype=jnp.int32)

    # Kaiming-normal weights (matching _init_weight), zero biases.
    w1 = jax.random.normal(k_w1, (in_dim, hidden_dim), jnp.float32) * jnp.sqrt(2.0 / in_dim)
    b1 = jnp.zeros((hidden_dim,), jnp.float32)
    w2 = jax.random.normal(k_w2, (hidden_dim, feat_dim), jnp.float32) * jnp.sqrt(2.0 / hidden_dim)
    b2 = jnp.zeros((feat_dim,), jnp.float32)
    params = (w1, b1, w2, b2)

    out = position_relation_encode(obj_feats, bboxes_embedding, pairs, params)
    out = jax.block_until_ready(out)

    ref = _reference_forward(obj_feats, bboxes_embedding, pairs, params)
    assert out.shape == (n_obj, feat_dim)
    assert out.dtype == obj_feats.dtype
    assert bool(jnp.allclose(out, ref, rtol=5e-2, atol=5e-2)), float(
        jnp.max(jnp.abs(out - ref))
    )

    print("KERNEL_OK")
</pallas_src>

<mosaic_0001>
module attributes {stable_mosaic.version = 11 : i64} {
  func.func @_fused_mlp_kernel(%arg0: i32, %arg1: i32, %arg2: memref<128x384xbf16, #tpu.memory_space<vmem>>, %arg3: memref<384x128xbf16, #tpu.memory_space<vmem>>, %arg4: memref<1x128xf32, #tpu.memory_space<vmem>>, %arg5: memref<128x128xbf16, #tpu.memory_space<vmem>>, %arg6: memref<1x128xf32, #tpu.memory_space<vmem>>, %arg7: memref<128x128xbf16, #tpu.memory_space<vmem>>, %arg8: memref<128x128xf32, #tpu.memory_space<vmem>>) attributes {dimension_semantics = [#tpu.dimension_semantics<parallel>, #tpu.dimension_semantics<arbitrary>], iteration_bounds = array<i64: 1, 1>, scalar_prefetch = 0 : i64, scratch_operands = 1 : i64, tpu.core_type = #tpu.core_type<tc>, window_params = [{transform_indices = @transform_0, window_bounds = array<i64: 128, 384>}, {transform_indices = @transform_1, window_bounds = array<i64: 384, 128>}, {pipeline_mode = #tpu.pipeline_mode<synchronous>, transform_indices = @transform_2, window_bounds = array<i64: 1, 128>}, {pipeline_mode = #tpu.pipeline_mode<synchronous>, transform_indices = @transform_3, window_bounds = array<i64: 128, 128>}, {pipeline_mode = #tpu.pipeline_mode<synchronous>, transform_indices = @transform_4, window_bounds = array<i64: 1, 128>}, {transform_indices = @transform_5, window_bounds = array<i64: 128, 128>}]} {
    %c0_i32 = arith.constant 0 : i32
    %0 = arith.cmpi eq, %arg1, %c0_i32 : i32
    %1 = arith.extui %0 : i1 to i32
    %c0_i32_0 = arith.constant 0 : i32
    %2 = arith.cmpi ne, %1, %c0_i32_0 : i32
    scf.if %2 {
      %cst_10 = arith.constant 0.000000e+00 : f32
      %12 = vector.broadcast %cst_10 : f32 to vector<128x128xf32>
      %c0_11 = arith.constant 0 : index
      %c0_12 = arith.constant 0 : index
      %13 = vector.load %arg8[%c0_11, %c0_12] : memref<128x128xf32, #tpu.memory_space<vmem>>, vector<128x128xf32>
      tpu.vector_store %arg8[%c0_11, %c0_12], %12 {strides = array<i32>} : memref<128x128xf32, #tpu.memory_space<vmem>>, vector<128x128xf32>,
    } else {
    }
    %c0 = arith.constant 0 : index
    %c0_1 = arith.constant 0 : index
    %3 = vector.load %arg8[%c0, %c0_1] : memref<128x128xf32, #tpu.memory_space<vmem>>, vector<128x128xf32>
    %c0_2 = arith.constant 0 : index
    %c0_3 = arith.constant 0 : index
    %4 = vector.load %arg2[%c0_2, %c0_3] : memref<128x384xbf16, #tpu.memory_space<vmem>>, vector<128x384xbf16>
    %c0_4 = arith.constant 0 : index
    %c0_5 = arith.constant 0 : index
    %5 = vector.load %arg3[%c0_4, %c0_5] : memref<384x128xbf16, #tpu.memory_space<vmem>>, vector<384x128xbf16>
    %cst = arith.constant dense<0.000000e+00> : vector<128x128xf32>
    %6 = tpu.matmul %4, %5, %cst {dimension_numbers = #tpu.dot_dimension_numbers<[1], [0], [0], [1], [0, 0, 1, 1], [], []>} : vector<128x384xbf16>, vector<384x128xbf16>, vector<128x128xf32> -> vector<128x128xf32>
    %7 = arith.addf %3, %6 : vector<128x128xf32>
    %c0_6 = arith.constant 0 : index
    %c0_7 = arith.constant 0 : index
    %8 = vector.load %arg8[%c0_6, %c0_7] : memref<128x128xf32, #tpu.memory_space<vmem>>, vector<128x128xf32>
    tpu.vector_store %arg8[%c0_6, %c0_7], %7 {strides = array<i32>} : memref<128x128xf32, #tpu.memory_space<vmem>>, vector<128x128xf32>,
    %c0_i32_8 = arith.constant 0 : i32
    %9 = arith.cmpi eq, %arg1, %c0_i32_8 : i32
    %10 = arith.extui %9 : i1 to i32
    %c0_i32_9 = arith.constant 0 : i32
    %11 = arith.cmpi ne, %10, %c0_i32_9 : i32
    scf.if %11 {
      %c0_10 = arith.constant 0 : index
      %c0_11 = arith.constant 0 : index
      %12 = vector.load %arg8[%c0_10, %c0_11] : memref<128x128xf32, #tpu.memory_space<vmem>>, vector<128x128xf32>
      %c0_12 = arith.constant 0 : index
      %c0_13 = arith.constant 0 : index
      %13 = vector.load %arg4[%c0_12, %c0_13] : memref<1x128xf32, #tpu.memory_space<vmem>>, vector<1x128xf32>
      %14 = vector.broadcast %13 : vector<1x128xf32> to vector<128x128xf32>
      %15 = arith.addf %12, %14 : vector<128x128xf32>
      %cst_14 = arith.constant 0.000000e+00 : f32
      %16 = vector.broadcast %cst_14 : f32 to vector<128x128xf32>
      %17 = arith.maximumf %15, %16 : vector<128x128xf32>
      %18 = arith.truncf %17 : vector<128x128xf32> to vector<128x128xbf16>
      %c0_15 = arith.constant 0 : index
      %c0_16 = arith.constant 0 : index
      %19 = vector.load %arg5[%c0_15, %c0_16] : memref<128x128xbf16, #tpu.memory_space<vmem>>, vector<128x128xbf16>
      %cst_17 = arith.constant dense<0.000000e+00> : vector<128x128xf32>
      %20 = tpu.matmul %18, %19, %cst_17 {dimension_numbers = #tpu.dot_dimension_numbers<[1], [0], [0], [1], [0, 0, 1, 1], [], []>} : vector<128x128xbf16>, vector<128x128xbf16>, vector<128x128xf32> -> vector<128x128xf32>
      %c0_18 = arith.constant 0 : index
      %c0_19 = arith.constant 0 : index
      %21 = vector.load %arg6[%c0_18, %c0_19] : memref<1x128xf32, #tpu.memory_space<vmem>>, vector<1x128xf32>
      %22 = vector.broadcast %21 : vector<1x128xf32> to vector<128x128xf32>
      %23 = arith.addf %20, %22 : vector<128x128xf32>
      %24 = arith.truncf %23 : vector<128x128xf32> to vector<128x128xbf16>
      %c0_20 = arith.constant 0 : index
      %c0_21 = arith.constant 0 : index
      %25 = vector.load %arg7[%c0_20, %c0_21] : memref<128x128xbf16, #tpu.memory_space<vmem>>, vector<128x128xbf16>
      tpu.vector_store %arg7[%c0_20, %c0_21], %24 {strides = array<i32>} : memref<128x128xbf16, #tpu.memory_space<vmem>>, vector<128x128xbf16>,
    } else {
    }
    return
  }
  func.func @transform_0(%arg0: i32, %arg1: i32) -> (i32, i32) {
    %c0_i32 = arith.constant 0 : i32
    return %arg0, %arg1 : i32, i32
  }
  func.func @transform_1(%arg0: i32, %arg1: i32) -> (i32, i32) {
    %c0_i32 = arith.constant 0 : i32
    %c0_i32_0 = arith.constant 0 : i32
    return %arg1, %c0_i32 : i32, i32
  }
  func.func @transform_2(%arg0: i32, %arg1: i32) -> (i32, i32) {
    %c0_i32 = arith.constant 0 : i32
    %c0_i32_0 = arith.constant 0 : i32
    %c0_i32_1 = arith.constant 0 : i32
    return %c0_i32, %c0_i32_0 : i32, i32
  }
  func.func @transform_3(%arg0: i32, %arg1: i32) -> (i32, i32) {
    %c0_i32 = arith.constant 0 : i32
    %c0_i32_0 = arith.constant 0 : i32
    %c0_i32_1 = arith.constant 0 : i32
    return %c0_i32, %c0_i32_0 : i32, i32
  }
  func.func @transform_4(%arg0: i32, %arg1: i32) -> (i32, i32) {
    %c0_i32 = arith.constant 0 : i32
    %c0_i32_0 = arith.constant 0 : i32
    %c0_i32_1 = arith.constant 0 : i32
    return %c0_i32, %c0_i32_0 : i32, i32
  }
  func.func @transform_5(%arg0: i32, %arg1: i32) -> (i32, i32) {
    %c0_i32 = arith.constant 0 : i32
    %c0_i32_0 = arith.constant 0 : i32
    return %arg0, %c0_i32 : i32, i32
  }
}

</mosaic_0001>

<llo_original>
// kernel: tpu_custom_call.1
$region0: #{tpu_custom_call.1}
  #allocation0 [shape = 'u32[]', space=smem, size = 0x4, offset = 0x4, fixed_abs, tag = 'smem constant byte address 0x4 - core index']
  #allocation1 [shape = 'u32[72,128]{1,0:T(1,128)}', space=vmem, size = 0x9000, scoped, tag = 'internal scratch']
  #allocation2 [shape = 'f32[128,128]{1,0:T(8,128)}', space=vmem, size = 0x10000, scoped, tag = 'scratch operand']
  %s0 = inlined_call_operand.hbm [shape: bf16[128,384], index: 0, kind: input, shape index: {}]
  %s1 = inlined_call_operand.hbm [shape: bf16[384,128], index: 1, kind: input, shape index: {}]
  %s2 = inlined_call_operand.vmem [shape: f32[1,128], index: 2, kind: input, shape index: {}]
  %s3 = inlined_call_operand.hbm [shape: bf16[128,128], index: 3, kind: input, shape index: {}]
  %s4 = inlined_call_operand.vmem [shape: f32[1,128], index: 4, kind: input, shape index: {}]
  %s5 = inlined_call_operand.hbm [shape: bf16[128,128], index: 5, kind: output, shape index: {}]
  %s6 = sld [smem:[#allocation0]]
  $region50: #{tpu_custom_call.1} parent=0
    _
  %s8 = ssub.s32 1, %s6
  %s9 = scalar_select 0, %s8, %s6
  $region1: #{tpu_custom_call.1} parent=0
    #allocation3 [shape = 'u8[98304]{0}', space=vmem, size = 0x18000, scoped, tag = 'input window, operand 0, single buffered']
    #allocation4 [shape = 's32[1]{0}', space=sflag, size = 0x4, scoped, tag = 'scoped memory for tpu_custom_call.1']
    #allocation5 [shape = 's32[1]{0}', space=sflag, size = 0x4, scoped, tag = 'scoped memory for tpu_custom_call.1']
    #allocation6 [shape = 'u8[98304]{0}', space=vmem, size = 0x18000, scoped, tag = 'input window, operand 1, single buffered']
    #allocation7 [shape = 's32[1]{0}', space=sflag, size = 0x4, scoped, tag = 'scoped memory for tpu_custom_call.1']
    #allocation8 [shape = 'u8[32768]{0}', space=vmem, size = 0x8000, scoped, tag = 'input window, operand 3, single buffered']
    #allocation9 [shape = 'u8[32768]{0}', space=vmem, size = 0x8000, scoped, tag = 'output window, operand 0, single buffered']
    %10 = vsyncpa [#allocation4], 0
    %11 = vsyncpa [#allocation7], 0
    %12 = vsyncpa [#allocation5], 0
    // Predicated region
    $region2: #{tpu_custom_call.1} parent=1 // pred_check
      _
    $region3: #{tpu_custom_call.1} parent=1 // pred_check_branch
      %14 = sbr.rel (0) target = $region5
    $region4: #{tpu_custom_call.1} parent=1 // pred_region
      %16 = vsyncadd [#allocation4], 0
      %s17 = sshll.u32 %s0, 4
      %s18 = int_to_ptr.hbm [resolvable:$true] %s17
      %s19 = sshll.u32 [#allocation3], 4
      %s20 = int_to_ptr.vmem [resolvable:$true] %s19
      %25 = dma.hbm_to_vmem [thread:$0]  %s18, 3072, %s20, [#allocation4], 192, 192, 12
    $region5: #{tpu_custom_call.1} parent=1 // pred_fallthru
      _
    // Predicated region
    $region6: #{tpu_custom_call.1} parent=1 // pred_check
      _
    $region7: #{tpu_custom_call.1} parent=1 // pred_check_branch
      %27 = sbr.rel (0) target = $region9
    $region8: #{tpu_custom_call.1} parent=1 // pred_region
      %29 = vsyncadd [#allocation7], 0
      %s30 = sshll.u32 %s1, 4
      %s31 = int_to_ptr.hbm [resolvable:$true] %s30
      %s32 = sshll.u32 [#allocation6], 4
      %s33 = int_to_ptr.vmem [resolvable:$true] %s32
      %38 = dma.hbm_to_vmem [thread:$0]  %s31, 3072, %s33, [#allocation7], 64, 64, 4
    $region9: #{tpu_custom_call.1} parent=1 // pred_fallthru
      _
    // Predicated region
    $region10: #{tpu_custom_call.1} parent=1 // pred_check
      _
    $region11: #{tpu_custom_call.1} parent=1 // pred_check_branch
      %40 = sbr.rel (0) target = $region13
    $region12: #{tpu_custom_call.1} parent=1 // pred_region
      _
    $region13: #{tpu_custom_call.1} parent=1 // pred_fallthru
      _
    // Predicated region
    $region14: #{tpu_custom_call.1} parent=1 // pred_check
      _
    $region15: #{tpu_custom_call.1} parent=1 // pred_check_branch
      %42 = sbr.rel (0) target = $region17
    $region16: #{tpu_custom_call.1} parent=1 // pred_region
      %44 = vsyncadd [#allocation7], 0
      %s45 = sshll.u32 %s3, 4
      %s46 = int_to_ptr.hbm [resolvable:$true] %s45
      %s47 = sshll.u32 [#allocation8], 4
      %s48 = int_to_ptr.vmem [resolvable:$true] %s47
      %53 = dma.hbm_to_vmem [thread:$0]  %s46, 1024, %s48, [#allocation7], 64, 64, 4
    $region17: #{tpu_custom_call.1} parent=1 // pred_fallthru
      _
    // Predicated region
    $region18: #{tpu_custom_call.1} parent=1 // pred_check
      _
    $region19: #{tpu_custom_call.1} parent=1 // pred_check_branch
      %55 = sbr.rel (0) target = $region21
    $region20: #{tpu_custom_call.1} parent=1 // pred_region
      _
    $region21: #{tpu_custom_call.1} parent=1 // pred_fallthru
      _
    // Predicated region
    $region22: #{tpu_custom_call.1} parent=1 // pred_check
      _
    $region23: #{tpu_custom_call.1} parent=1 // pred_check_branch
      %57 = sbr.rel (0) target = $region25
    $region24: #{tpu_custom_call.1} parent=1 // pred_region
      %59 = dma.done [#allocation4], 3072
    $region25: #{tpu_custom_call.1} parent=1 // pred_fallthru
      _
    // Predicated region
    $region26: #{tpu_custom_call.1} parent=1 // pred_check
      _
    $region27: #{tpu_custom_call.1} parent=1 // pred_check_branch
      %61 = sbr.rel (0) target = $region29
    $region28: #{tpu_custom_call.1} parent=1 // pred_region
      %63 = dma.done [#allocation7], 3072
    $region29: #{tpu_custom_call.1} parent=1 // pred_fallthru
      _
    // Predicated region
    $region30: #{tpu_custom_call.1} parent=1 // pred_check
      _
    $region31: #{tpu_custom_call.1} parent=1 // pred_check_branch
      %65 = sbr.rel (0) target = $region33
    $region32: #{tpu_custom_call.1} parent=1 // pred_region
      %67 = dma.done [#allocation7], 1024
    $region33: #{tpu_custom_call.1} parent=1 // pred_fallthru
      _
    %p68 = scmp.eq.s32.totalorder 0, 0
    // Predicated region
    $region34: #{tpu_custom_call.1} parent=1 // pred_check
      %p69 = pneg %p68
    $region35: #{tpu_custom_call.1} parent=1 // pred_check_branch
      %71 = sbr.rel (%p69) target = $region37
    $region36: #{tpu_custom_call.1} parent=1 // pred_region
      %72 = vst [vmem:[#allocation2] sm:$0xff] 0.0
      %73 = vst [vmem:[#allocation2 + $0x8] sm:$0xff] 0.0
      %74 = vst [vmem:[#allocation2 + $0x10] sm:$0xff] 0.0
      %75 = vst [vmem:[#allocation2 + $0x18] sm:$0xff] 0.0
      %76 = vst [vmem:[#allocation2 + $0x20] sm:$0xff] 0.0
      %77 = vst [vmem:[#allocation2 + $0x28] sm:$0xff] 0.0
      %78 = vst [vmem:[#allocation2 + $0x30] sm:$0xff] 0.0
      %79 = vst [vmem:[#allocation2 + $0x38] sm:$0xff] 0.0
      %80 = vst [vmem:[#allocation2 + $0x40] sm:$0xff] 0.0
      %81 = vst [vmem:[#allocation2 + $0x48] sm:$0xff] 0.0
      %82 = vst [vmem:[#allocation2 + $0x50] sm:$0xff] 0.0
      %83 = vst [vmem:[#allocation2 + $0x58] sm:$0xff] 0.0
      %84 = vst [vmem:[#allocation2 + $0x60] sm:$0xff] 0.0
      %85 = vst [vmem:[#allocation2 + $0x68] sm:$0xff] 0.0
      %86 = vst [vmem:[#allocation2 + $0x70] sm:$0xff] 0.0
      %87 = vst [vmem:[#allocation2 + $0x78] sm:$0xff] 0.0
    $region37: #{tpu_custom_call.1} parent=1 // pred_fallthru
      _
    %v88 = vld [vmem:[#allocation2] sm:$0xff]
    %v89 = vld [vmem:[#allocation2 + $0x8] sm:$0xff]
    %v90 = vld [vmem:[#allocation2 + $0x10] sm:$0xff]
    %v91 = vld [vmem:[#allocation2 + $0x18] sm:$0xff]
    %v92 = vld [vmem:[#allocation2 + $0x20] sm:$0xff]
    %v93 = vld [vmem:[#allocation2 + $0x28] sm:$0xff]
    %v94 = vld [vmem:[#allocation2 + $0x30] sm:$0xff]
    %v95 = vld [vmem:[#allocation2 + $0x38] sm:$0xff]
    %v96 = vld [vmem:[#allocation2 + $0x40] sm:$0xff]
    %v97 = vld [vmem:[#allocation2 + $0x48] sm:$0xff]
    %v98 = vld [vmem:[#allocation2 + $0x50] sm:$0xff]
    %v99 = vld [vmem:[#allocation2 + $0x58] sm:$0xff]
    %v100 = vld [vmem:[#allocation2 + $0x60] sm:$0xff]
    %v101 = vld [vmem:[#allocation2 + $0x68] sm:$0xff]
    %v102 = vld [vmem:[#allocation2 + $0x70] sm:$0xff]
    %v103 = vld [vmem:[#allocation2 + $0x78] sm:$0xff]
    %v104 = vld [vmem:[#allocation3] sm:$0xff]
    %v105 = vld [vmem:[#allocation3 + $0x8] sm:$0xf]
    %v106 = vld [vmem:[#allocation3 + $0xc] sm:$0xff]
    %v107 = vld [vmem:[#allocation3 + $0x14] sm:$0xf]
    %v108 = vld [vmem:[#allocation3 + $0x18] sm:$0xff]
    %v109 = vld [vmem:[#allocation3 + $0x20] sm:$0xf]
    %v110 = vld [vmem:[#allocation3 + $0x24] sm:$0xff]
    %v111 = vld [vmem:[#allocation3 + $0x2c] sm:$0xf]
    %v112 = vld [vmem:[#allocation3 + $0x30] sm:$0xff]
    %v113 = vld [vmem:[#allocation3 + $0x38] sm:$0xf]
    %v114 = vld [vmem:[#allocation3 + $0x3c] sm:$0xff]
    %v115 = vld [vmem:[#allocation3 + $0x44] sm:$0xf]
    %v116 = vld [vmem:[#allocation3 + $0x48] sm:$0xff]
    %v117 = vld [vmem:[#allocation3 + $0x50] sm:$0xf]
    %v118 = vld [vmem:[#allocation3 + $0x54] sm:$0xff]
    %v119 = vld [vmem:[#allocation3 + $0x5c] sm:$0xf]
    %v120 = vld [vmem:[#allocation3 + $0x60] sm:$0xff]
    %v121 = vld [vmem:[#allocation3 + $0x68] sm:$0xf]
    %v122 = vld [vmem:[#allocation3 + $0x6c] sm:$0xff]
    %v123 = vld [vmem:[#allocation3 + $0x74] sm:$0xf]
    %v124 = vld [vmem:[#allocation3 + $0x78] sm:$0xff]
    %v125 = vld [vmem:[#allocation3 + $0x80] sm:$0xf]
    %v126 = vld [vmem:[#allocation3 + $0x84] sm:$0xff]
    %v127 = vld [vmem:[#allocation3 + $0x8c] sm:$0xf]
    %v128 = vld [vmem:[#allocation3 + $0x90] sm:$0xff]
    %v129 = vld [vmem:[#allocation3 + $0x98] sm:$0xf]
    %v130 = vld [vmem:[#allocation3 + $0x9c] sm:$0xff]
    %v131 = vld [vmem:[#allocation3 + $0xa4] sm:$0xf]
    %v132 = vld [vmem:[#allocation3 + $0xa8] sm:$0xff]
    %v133 = vld [vmem:[#allocation3 + $0xb0] sm:$0xf]
    %v134 = vld [vmem:[#allocation3 + $0xb4] sm:$0xff]
    %v135 = vld [vmem:[#allocation3 + $0xbc] sm:$0xf]
    %v136 = vld [vmem:[#allocation6] sm:$0xf]
    %v137 = vld [vmem:[#allocation6 + $0x4] sm:$0xf]
    %v138 = vld [vmem:[#allocation6 + $0x8] sm:$0xf]
    %v139 = vld [vmem:[#allocation6 + $0xc] sm:$0xf]
    %v140 = vld [vmem:[#allocation6 + $0x10] sm:$0xf]
    %v141 = vld [vmem:[#allocation6 + $0x14] sm:$0xf]
    %v142 = vld [vmem:[#allocation6 + $0x18] sm:$0xf]
    %v143 = vld [vmem:[#allocation6 + $0x1c] sm:$0xf]
    %v144 = vld [vmem:[#allocation6 + $0x20] sm:$0xf]
    %v145 = vld [vmem:[#allocation6 + $0x24] sm:$0xf]
    %v146 = vld [vmem:[#allocation6 + $0x28] sm:$0xf]
    %v147 = vld [vmem:[#allocation6 + $0x2c] sm:$0xf]
    %v148 = vld [vmem:[#allocation6 + $0x30] sm:$0xf]
    %v149 = vld [vmem:[#allocation6 + $0x34] sm:$0xf]
    %v150 = vld [vmem:[#allocation6 + $0x38] sm:$0xf]
    %v151 = vld [vmem:[#allocation6 + $0x3c] sm:$0xf]
    %v152 = vld [vmem:[#allocation6 + $0x40] sm:$0xf]
    %v153 = vld [vmem:[#allocation6 + $0x44] sm:$0xf]
    %v154 = vld [vmem:[#allocation6 + $0x48] sm:$0xf]
    %v155 = vld [vmem:[#allocation6 + $0x4c] sm:$0xf]
    %v156 = vld [vmem:[#allocation6 + $0x50] sm:$0xf]
    %v157 = vld [vmem:[#allocation6 + $0x54] sm:$0xf]
    %v158 = vld [vmem:[#allocation6 + $0x58] sm:$0xf]
    %v159 = vld [vmem:[#allocation6 + $0x5c] sm:$0xf]
    %v160 = vld [vmem:[#allocation6 + $0x60] sm:$0xf]
    %v161 = vld [vmem:[#allocation6 + $0x64] sm:$0xf]
    %v162 = vld [vmem:[#allocation6 + $0x68] sm:$0xf]
    %v163 = vld [vmem:[#allocation6 + $0x6c] sm:$0xf]
    %v164 = vld [vmem:[#allocation6 + $0x70] sm:$0xf]
    %v165 = vld [vmem:[#allocation6 + $0x74] sm:$0xf]
    %v166 = vld [vmem:[#allocation6 + $0x78] sm:$0xf]
    %v167 = vld [vmem:[#allocation6 + $0x7c] sm:$0xf]
    %v168 = vld [vmem:[#allocation6 + $0x80] sm:$0xf]
    %v169 = vld [vmem:[#allocation6 + $0x84] sm:$0xf]
    %v170 = vld [vmem:[#allocation6 + $0x88] sm:$0xf]
    %v171 = vld [vmem:[#allocation6 + $0x8c] sm:$0xf]
    %v172 = vld [vmem:[#allocation6 + $0x90] sm:$0xf]
    %v173 = vld [vmem:[#allocation6 + $0x94] sm:$0xf]
    %v174 = vld [vmem:[#allocation6 + $0x98] sm:$0xf]
    %v175 = vld [vmem:[#allocation6 + $0x9c] sm:$0xf]
    %v176 = vld [vmem:[#allocation6 + $0xa0] sm:$0xf]
    %v177 = vld [vmem:[#allocation6 + $0xa4] sm:$0xf]
    %v178 = vld [vmem:[#allocation6 + $0xa8] sm:$0xf]
    %v179 = vld [vmem:[#allocation6 + $0xac] sm:$0xf]
    %v180 = vld [vmem:[#allocation6 + $0xb0] sm:$0xf]
    %v181 = vld [vmem:[#allocation6 + $0xb4] sm:$0xf]
    %v182 = vld [vmem:[#allocation6 + $0xb8] sm:$0xf]
    %v183 = vld [vmem:[#allocation6 + $0xbc] sm:$0xf]
    %v216 = vunpack.c.l.b16 %v104
    %v217 = vunpack.c.h.b16 %v104
    %v218 = vunpack.c.l.b16 %v105
    %v219 = vunpack.c.l.b16 %v106
    %v220 = vunpack.c.h.b16 %v106
    %v221 = vunpack.c.l.b16 %v107
    %v222 = vunpack.c.l.b16 %v108
    %v223 = vunpack.c.h.b16 %v108
    %v224 = vunpack.c.l.b16 %v109
    %v225 = vunpack.c.l.b16 %v110
    %v226 = vunpack.c.h.b16 %v110
    %v227 = vunpack.c.l.b16 %v111
    %v228 = vunpack.c.l.b16 %v112
    %v229 = vunpack.c.h.b16 %v112
    %v230 = vunpack.c.l.b16 %v113
    %v231 = vunpack.c.l.b16 %v114
    %v232 = vunpack.c.h.b16 %v114
    %v233 = vunpack.c.l.b16 %v115
    %v234 = vunpack.c.l.b16 %v116
    %v235 = vunpack.c.h.b16 %v116
    %v236 = vunpack.c.l.b16 %v117
    %v237 = vunpack.c.l.b16 %v118
    %v238 = vunpack.c.h.b16 %v118
    %v239 = vunpack.c.l.b16 %v119
    %v240 = vunpack.c.l.b16 %v120
    %v241 = vunpack.c.h.b16 %v120
    %v242 = vunpack.c.l.b16 %v121
    %v243 = vunpack.c.l.b16 %v122
    %v244 = vunpack.c.h.b16 %v122
    %v245 = vunpack.c.l.b16 %v123
    %v246 = vunpack.c.l.b16 %v124
    %v247 = vunpack.c.h.b16 %v124
    %v248 = vunpack.c.l.b16 %v125
    %v249 = vunpack.c.l.b16 %v126
    %v250 = vunpack.c.h.b16 %v126
    %v251 = vunpack.c.l.b16 %v127
    %v252 = vunpack.c.l.b16 %v128
    %v253 = vunpack.c.h.b16 %v128
    %v254 = vunpack.c.l.b16 %v129
    %v255 = vunpack.c.l.b16 %v130
    %v256 = vunpack.c.h.b16 %v130
    %v257 = vunpack.c.l.b16 %v131
    %v258 = vunpack.c.l.b16 %v132
    %v259 = vunpack.c.h.b16 %v132
    %v260 = vunpack.c.l.b16 %v133
    %v261 = vunpack.c.l.b16 %v134
    %v262 = vunpack.c.h.b16 %v134
    %v263 = vunpack.c.l.b16 %v135
    %v264 = vpack.c.b16 %v219, %v216
    %v265 = vpack.c.b16 %v220, %v217
    %v266 = vpack.c.b16 %v221, %v218
    %v267 = vpack.c.b16 %v225, %v222
    %v268 = vpack.c.b16 %v226, %v223
    %v269 = vpack.c.b16 %v227, %v224
    %v270 = vpack.c.b16 %v231, %v228
    %v271 = vpack.c.b16 %v232, %v229
    %v272 = vpack.c.b16 %v233, %v230
    %v273 = vpack.c.b16 %v237, %v234
    %v274 = vpack.c.b16 %v238, %v235
    %v275 = vpack.c.b16 %v239, %v236
    %v276 = vpack.c.b16 %v243, %v240
    %v277 = vpack.c.b16 %v244, %v241
    %v278 = vpack.c.b16 %v245, %v242
    %v279 = vpack.c.b16 %v249, %v246
    %v280 = vpack.c.b16 %v250, %v247
    %v281 = vpack.c.b16 %v251, %v248
    %v282 = vpack.c.b16 %v255, %v252
    %v283 = vpack.c.b16 %v256, %v253
    %v284 = vpack.c.b16 %v257, %v254
    %v285 = vpack.c.b16 %v261, %v258
    %v286 = vpack.c.b16 %v262, %v259
    %v287 = vpack.c.b16 %v263, %v260
    %v360 = vunpack.c.l.b16 %v136
    %v361 = vunpack.c.l.b16 %v137
    %v362 = vunpack.c.l.b16 %v138
    %v363 = vunpack.c.l.b16 %v139
    %v364 = vunpack.c.l.b16 %v140
    %v365 = vunpack.c.l.b16 %v141
    %v366 = vunpack.c.l.b16 %v142
    %v367 = vunpack.c.l.b16 %v143
    %v368 = vunpack.c.l.b16 %v144
    %v369 = vunpack.c.l.b16 %v145
    %v370 = vunpack.c.l.b16 %v146
    %v371 = vunpack.c.l.b16 %v147
    %v372 = vunpack.c.l.b16 %v148
    %v373 = vunpack.c.l.b16 %v149
    %v374 = vunpack.c.l.b16 %v150
    %v375 = vunpack.c.l.b16 %v151
    %v376 = vunpack.c.l.b16 %v152
    %v377 = vunpack.c.l.b16 %v153
    %v378 = vunpack.c.l.b16 %v154
    %v379 = vunpack.c.l.b16 %v155
    %v380 = vunpack.c.l.b16 %v156
    %v381 = vunpack.c.l.b16 %v157
    %v382 = vunpack.c.l.b16 %v158
    %v383 = vunpack.c.l.b16 %v159
    %v384 = vunpack.c.l.b16 %v160
    %v385 = vunpack.c.l.b16 %v161
    %v386 = vunpack.c.l.b16 %v162
    %v387 = vunpack.c.l.b16 %v163
    %v388 = vunpack.c.l.b16 %v164
    %v389 = vunpack.c.l.b16 %v165
    %v390 = vunpack.c.l.b16 %v166
    %v391 = vunpack.c.l.b16 %v167
    %v392 = vunpack.c.l.b16 %v168
    %v393 = vunpack.c.l.b16 %v169
    %v394 = vunpack.c.l.b16 %v170
    %v395 = vunpack.c.l.b16 %v171
    %v396 = vunpack.c.l.b16 %v172
    %v397 = vunpack.c.l.b16 %v173
    %v398 = vunpack.c.l.b16 %v174
    %v399 = vunpack.c.l.b16 %v175
    %v400 = vunpack.c.l.b16 %v176
    %v401 = vunpack.c.l.b16 %v177
    %v402 = vunpack.c.l.b16 %v178
    %v403 = vunpack.c.l.b16 %v179
    %v404 = vunpack.c.l.b16 %v180
    %v405 = vunpack.c.l.b16 %v181
    %v406 = vunpack.c.l.b16 %v182
    %v407 = vunpack.c.l.b16 %v183
    %v408 = vpack.c.b16 %v361, %v360
    %v409 = vpack.c.b16 %v363, %v362
    %v410 = vpack.c.b16 %v365, %v364
    %v411 = vpack.c.b16 %v367, %v366
    %v412 = vpack.c.b16 %v369, %v368
    %v413 = vpack.c.b16 %v371, %v370
    %v414 = vpack.c.b16 %v373, %v372
    %v415 = vpack.c.b16 %v375, %v374
    %v416 = vpack.c.b16 %v377, %v376
    %v417 = vpack.c.b16 %v379, %v378
    %v418 = vpack.c.b16 %v381, %v380
    %v419 = vpack.c.b16 %v383, %v382
    %v420 = vpack.c.b16 %v385, %v384
    %v421 = vpack.c.b16 %v387, %v386
    %v422 = vpack.c.b16 %v389, %v388
    %v423 = vpack.c.b16 %v391, %v390
    %v424 = vpack.c.b16 %v393, %v392
    %v425 = vpack.c.b16 %v395, %v394
    %v426 = vpack.c.b16 %v397, %v396
    %v427 = vpack.c.b16 %v399, %v398
    %v428 = vpack.c.b16 %v401, %v400
    %v429 = vpack.c.b16 %v403, %v402
    %v430 = vpack.c.b16 %v405, %v404
    %v431 = vpack.c.b16 %v407, %v406
    %456 = vmatpush.bf16.msra.mxu0 %v415
    %457 = vmatpush.bf16.msra.mxu0 %v414
    %458 = vmatpush.bf16.msra.mxu0 %v413
    %459 = vmatpush.bf16.msra.mxu0 %v412
    %460 = vmatpush.bf16.msra.mxu0 %v411
    %461 = vmatpush.bf16.msra.mxu0 %v410
    %462 = vmatpush.bf16.msra.mxu0 %v409
    %463 = vmatpush.bf16.msra.mxu0 %v408
    %464 = vmatmul.bf16.gmra.mxu0 %v264
    %v465 = vpop.f32.mrf.mxu0
    %v466 = vadd.f32 0.0, %v465
    %v467 = vpop.f32.mrf.mxu0
    %v468 = vadd.f32 0.0, %v467
    %469 = vmatmul.bf16.gmra.mxu0 %v267
    %v470 = vpop.f32.mrf.mxu0
    %v471 = vadd.f32 0.0, %v470
    %v472 = vpop.f32.mrf.mxu0
    %v473 = vadd.f32 0.0, %v472
    %474 = vmatmul.bf16.gmra.mxu0 %v270
    %v475 = vpop.f32.mrf.mxu0
    %v476 = vadd.f32 0.0, %v475
    %v477 = vpop.f32.mrf.mxu0
    %v478 = vadd.f32 0.0, %v477
    %479 = vmatmul.bf16.gmra.mxu0 %v273
    %v480 = vpop.f32.mrf.mxu0
    %v481 = vadd.f32 0.0, %v480
    %v482 = vpop.f32.mrf.mxu0
    %v483 = vadd.f32 0.0, %v482
    %484 = vmatmul.bf16.gmra.mxu0 %v276
    %v485 = vpop.f32.mrf.mxu0
    %v486 = vadd.f32 0.0, %v485
    %v487 = vpop.f32.mrf.mxu0
    %v488 = vadd.f32 0.0, %v487
    %489 = vmatmul.bf16.gmra.mxu0 %v279
    %v490 = vpop.f32.mrf.mxu0
    %v491 = vadd.f32 0.0, %v490
    %v492 = vpop.f32.mrf.mxu0
    %v493 = vadd.f32 0.0, %v492
    %494 = vmatmul.bf16.gmra.mxu0 %v282
    %v495 = vpop.f32.mrf.mxu0
    %v496 = vadd.f32 0.0, %v495
    %v497 = vpop.f32.mrf.mxu0
    %v498 = vadd.f32 0.0, %v497
    %499 = vmatmul.bf16.gmra.mxu0 %v285
    %v500 = vpop.f32.mrf.mxu0
    %v501 = vadd.f32 0.0, %v500
    %v502 = vpop.f32.mrf.mxu0
    %v503 = vadd.f32 0.0, %v502
    %504 = vdwg.mxu0
    %505 = vmatpush.bf16.msra.mxu0 %v423
    %506 = vmatpush.bf16.msra.mxu0 %v422
    %507 = vmatpush.bf16.msra.mxu0 %v421
    %508 = vmatpush.bf16.msra.mxu0 %v420
    %509 = vmatpush.bf16.msra.mxu0 %v419
    %510 = vmatpush.bf16.msra.mxu0 %v418
    %511 = vmatpush.bf16.msra.mxu0 %v417
    %512 = vmatpush.bf16.msra.mxu0 %v416
    %513 = vmatmul.bf16.gmra.mxu0 %v265
    %v514 = vpop.f32.mrf.mxu0
    %v515 = vadd.f32 %v466, %v514
    %v516 = vpop.f32.mrf.mxu0
    %v517 = vadd.f32 %v468, %v516
    %518 = vmatmul.bf16.gmra.mxu0 %v268
    %v519 = vpop.f32.mrf.mxu0
    %v520 = vadd.f32 %v471, %v519
    %v521 = vpop.f32.mrf.mxu0
    %v522 = vadd.f32 %v473, %v521
    %523 = vmatmul.bf16.gmra.mxu0 %v271
    %v524 = vpop.f32.mrf.mxu0
    %v525 = vadd.f32 %v476, %v524
    %v526 = vpop.f32.mrf.mxu0
    %v527 = vadd.f32 %v478, %v526
    %528 = vmatmul.bf16.gmra.mxu0 %v274
    %v529 = vpop.f32.mrf.mxu0
    %v530 = vadd.f32 %v481, %v529
    %v531 = vpop.f32.mrf.mxu0
    %v532 = vadd.f32 %v483, %v531
    %533 = vmatmul.bf16.gmra.mxu0 %v277
    %v534 = vpop.f32.mrf.mxu0
    %v535 = vadd.f32 %v486, %v534
    %v536 = vpop.f32.mrf.mxu0
    %v537 = vadd.f32 %v488, %v536
    %538 = vmatmul.bf16.gmra.mxu0 %v280
    %v539 = vpop.f32.mrf.mxu0
    %v540 = vadd.f32 %v491, %v539
    %v541 = vpop.f32.mrf.mxu0
    %v542 = vadd.f32 %v493, %v541
    %543 = vmatmul.bf16.gmra.mxu0 %v283
    %v544 = vpop.f32.mrf.mxu0
    %v545 = vadd.f32 %v496, %v544
    %v546 = vpop.f32.mrf.mxu0
    %v547 = vadd.f32 %v498, %v546
    %548 = vmatmul.bf16.gmra.mxu0 %v286
    %v549 = vpop.f32.mrf.mxu0
    %v550 = vadd.f32 %v501, %v549
    %v551 = vpop.f32.mrf.mxu0
    %v552 = vadd.f32 %v503, %v551
    %553 = vdwg.mxu0
    %554 = vmatpush.bf16.msra.mxu0 %v431
    %555 = vmatpush.bf16.msra.mxu0 %v430
    %556 = vmatpush.bf16.msra.mxu0 %v429
    %557 = vmatpush.bf16.msra.mxu0 %v428
    %558 = vmatpush.bf16.msra.mxu0 %v427
    %559 = vmatpush.bf16.msra.mxu0 %v426
    %560 = vmatpush.bf16.msra.mxu0 %v425
    %561 = vmatpush.bf16.msra.mxu0 %v424
    %562 = vmatmul.bf16.gmra.mxu0 %v266
    %v563 = vpop.f32.mrf.mxu0
    %v564 = vadd.f32 %v515, %v563
    %v565 = vpop.f32.mrf.mxu0
    %v566 = vadd.f32 %v517, %v565
    %567 = vmatmul.bf16.gmra.mxu0 %v269
    %v568 = vpop.f32.mrf.mxu0
    %v569 = vadd.f32 %v520, %v568
    %v570 = vpop.f32.mrf.mxu0
    %v571 = vadd.f32 %v522, %v570
    %572 = vmatmul.bf16.gmra.mxu0 %v272
    %v573 = vpop.f32.mrf.mxu0
    %v574 = vadd.f32 %v525, %v573
    %v575 = vpop.f32.mrf.mxu0
    %v576 = vadd.f32 %v527, %v575
    %577 = vmatmul.bf16.gmra.mxu0 %v275
    %v578 = vpop.f32.mrf.mxu0
    %v579 = vadd.f32 %v530, %v578
    %v580 = vpop.f32.mrf.mxu0
    %v581 = vadd.f32 %v532, %v580
    %582 = vmatmul.bf16.gmra.mxu0 %v278
    %v583 = vpop.f32.mrf.mxu0
    %v584 = vadd.f32 %v535, %v583
    %v585 = vpop.f32.mrf.mxu0
    %v586 = vadd.f32 %v537, %v585
    %587 = vmatmul.bf16.gmra.mxu0 %v281
    %v588 = vpop.f32.mrf.mxu0
    %v589 = vadd.f32 %v540, %v588
    %v590 = vpop.f32.mrf.mxu0
    %v591 = vadd.f32 %v542, %v590
    %592 = vmatmul.bf16.gmra.mxu0 %v284
    %v593 = vpop.f32.mrf.mxu0
    %v594 = vadd.f32 %v545, %v593
    %v595 = vpop.f32.mrf.mxu0
    %v596 = vadd.f32 %v547, %v595
    %597 = vmatmul.bf16.gmra.mxu0 %v287
    %v598 = vpop.f32.mrf.mxu0
    %v599 = vadd.f32 %v550, %v598
    %v600 = vpop.f32.mrf.mxu0
    %v601 = vadd.f32 %v552, %v600
    %602 = vdwg.mxu0
    %v603 = vadd.f32 %v88, %v564
    %v604 = vadd.f32 %v89, %v566
    %v605 = vadd.f32 %v90, %v569
    %v606 = vadd.f32 %v91, %v571
    %v607 = vadd.f32 %v92, %v574
    %v608 = vadd.f32 %v93, %v576
    %v609 = vadd.f32 %v94, %v579
    %v610 = vadd.f32 %v95, %v581
    %v611 = vadd.f32 %v96, %v584
    %v612 = vadd.f32 %v97, %v586
    %v613 = vadd.f32 %v98, %v589
    %v614 = vadd.f32 %v99, %v591
    %v615 = vadd.f32 %v100, %v594
    %v616 = vadd.f32 %v101, %v596
    %v617 = vadd.f32 %v102, %v599
    %v618 = vadd.f32 %v103, %v601
    %619 = vst [vmem:[#allocation2] sm:$0xff] %v603
    %620 = vst [vmem:[#allocation2 + $0x8] sm:$0xff] %v604
    %621 = vst [vmem:[#allocation2 + $0x10] sm:$0xff] %v605
    %622 = vst [vmem:[#allocation2 + $0x18] sm:$0xff] %v606
    %623 = vst [vmem:[#allocation2 + $0x20] sm:$0xff] %v607
    %624 = vst [vmem:[#allocation2 + $0x28] sm:$0xff] %v608
    %625 = vst [vmem:[#allocation2 + $0x30] sm:$0xff] %v609
    %626 = vst [vmem:[#allocation2 + $0x38] sm:$0xff] %v610
    %627 = vst [vmem:[#allocation2 + $0x40] sm:$0xff] %v611
    %628 = vst [vmem:[#allocation2 + $0x48] sm:$0xff] %v612
    %629 = vst [vmem:[#allocation2 + $0x50] sm:$0xff] %v613
    %630 = vst [vmem:[#allocation2 + $0x58] sm:$0xff] %v614
    %631 = vst [vmem:[#allocation2 + $0x60] sm:$0xff] %v615
    %632 = vst [vmem:[#allocation2 + $0x68] sm:$0xff] %v616
    %633 = vst [vmem:[#allocation2 + $0x70] sm:$0xff] %v617
    %634 = vst [vmem:[#allocation2 + $0x78] sm:$0xff] %v618
    // Predicated region
    $region38: #{tpu_custom_call.1} parent=1 // pred_check
      %p635 = pneg %p68
    $region39: #{tpu_custom_call.1} parent=1 // pred_check_branch
      %637 = sbr.rel (%p635) target = $region41
    $region40: #{tpu_custom_call.1} parent=1 // pred_region
      %v638 = vld [vmem:[#allocation2] sm:$0xff]
      %v639 = vld [vmem:[#allocation2 + $0x8] sm:$0xff]
      %v640 = vld [vmem:[#allocation2 + $0x10] sm:$0xff]
      %v641 = vld [vmem:[#allocation2 + $0x18] sm:$0xff]
      %v642 = vld [vmem:[#allocation2 + $0x20] sm:$0xff]
      %v643 = vld [vmem:[#allocation2 + $0x28] sm:$0xff]
      %v644 = vld [vmem:[#allocation2 + $0x30] sm:$0xff]
      %v645 = vld [vmem:[#allocation2 + $0x38] sm:$0xff]
      %v646 = vld [vmem:[#allocation2 + $0x40] sm:$0xff]
      %v647 = vld [vmem:[#allocation2 + $0x48] sm:$0xff]
      %v648 = vld [vmem:[#allocation2 + $0x50] sm:$0xff]
      %v649 = vld [vmem:[#allocation2 + $0x58] sm:$0xff]
      %v650 = vld [vmem:[#allocation2 + $0x60] sm:$0xff]
      %v651 = vld [vmem:[#allocation2 + $0x68] sm:$0xff]
      %v652 = vld [vmem:[#allocation2 + $0x70] sm:$0xff]
      %v653 = vld [vmem:[#allocation2 + $0x78] sm:$0xff]
      %v654 = vld [vmem:[%s2] sm:$0x1]
      %v656 = vperm.slane %v654, 0
      %v658 = vadd.f32 %v638, %v656
      %v659 = vadd.f32 %v639, %v656
      %v660 = vadd.f32 %v640, %v656
      %v661 = vadd.f32 %v641, %v656
      %v662 = vadd.f32 %v642, %v656
      %v663 = vadd.f32 %v643, %v656
      %v664 = vadd.f32 %v644, %v656
      %v665 = vadd.f32 %v645, %v656
      %v666 = vadd.f32 %v646, %v656
      %v667 = vadd.f32 %v647, %v656
      %v668 = vadd.f32 %v648, %v656
      %v669 = vadd.f32 %v649, %v656
      %v670 = vadd.f32 %v650, %v656
      %v671 = vadd.f32 %v651, %v656
      %v672 = vadd.f32 %v652, %v656
      %v673 = vadd.f32 %v653, %v656
      %v674 = vmax.f32 %v658, 0.0
      %v675 = vmax.f32 %v659, 0.0
      %v676 = vmax.f32 %v660, 0.0
      %v677 = vmax.f32 %v661, 0.0
      %v678 = vmax.f32 %v662, 0.0
      %v679 = vmax.f32 %v663, 0.0
      %v680 = vmax.f32 %v664, 0.0
      %v681 = vmax.f32 %v665, 0.0
      %v682 = vmax.f32 %v666, 0.0
      %v683 = vmax.f32 %v667, 0.0
      %v684 = vmax.f32 %v668, 0.0
      %v685 = vmax.f32 %v669, 0.0
      %v686 = vmax.f32 %v670, 0.0
      %v687 = vmax.f32 %v671, 0.0
      %v688 = vmax.f32 %v672, 0.0
      %v689 = vmax.f32 %v673, 0.0
      %v690 = vpack.c.bf16 %v675, %v674
      %v691 = vpack.c.bf16 %v677, %v676
      %v692 = vpack.c.bf16 %v679, %v678
      %v693 = vpack.c.bf16 %v681, %v680
      %v694 = vpack.c.bf16 %v683, %v682
      %v695 = vpack.c.bf16 %v685, %v684
      %v696 = vpack.c.bf16 %v687, %v686
      %v697 = vpack.c.bf16 %v689, %v688
      %v698 = vld [vmem:[#allocation8] sm:$0xf]
      %v699 = vld [vmem:[#allocation8 + $0x4] sm:$0xf]
      %v700 = vld [vmem:[#allocation8 + $0x8] sm:$0xf]
      %v701 = vld [vmem:[#allocation8 + $0xc] sm:$0xf]
      %v702 = vld [vmem:[#allocation8 + $0x10] sm:$0xf]
      %v703 = vld [vmem:[#allocation8 + $0x14] sm:$0xf]
      %v704 = vld [vmem:[#allocation8 + $0x18] sm:$0xf]
      %v705 = vld [vmem:[#allocation8 + $0x1c] sm:$0xf]
      %v706 = vld [vmem:[#allocation8 + $0x20] sm:$0xf]
      %v707 = vld [vmem:[#allocation8 + $0x24] sm:$0xf]
      %v708 = vld [vmem:[#allocation8 + $0x28] sm:$0xf]
      %v709 = vld [vmem:[#allocation8 + $0x2c] sm:$0xf]
      %v710 = vld [vmem:[#allocation8 + $0x30] sm:$0xf]
      %v711 = vld [vmem:[#allocation8 + $0x34] sm:$0xf]
      %v712 = vld [vmem:[#allocation8 + $0x38] sm:$0xf]
      %v713 = vld [vmem:[#allocation8 + $0x3c] sm:$0xf]
      %v714 = vld [vmem:[%s4] sm:$0x1]
      %v716 = vperm.slane %v714, 0
      %v734 = vunpack.c.l.b16 %v698
      %v735 = vunpack.c.l.b16 %v699
      %v736 = vunpack.c.l.b16 %v700
      %v737 = vunpack.c.l.b16 %v701
      %v738 = vunpack.c.l.b16 %v702
      %v739 = vunpack.c.l.b16 %v703
      %v740 = vunpack.c.l.b16 %v704
      %v741 = vunpack.c.l.b16 %v705
      %v742 = vunpack.c.l.b16 %v706
      %v743 = vunpack.c.l.b16 %v707
      %v744 = vunpack.c.l.b16 %v708
      %v745 = vunpack.c.l.b16 %v709
      %v746 = vunpack.c.l.b16 %v710
      %v747 = vunpack.c.l.b16 %v711
      %v748 = vunpack.c.l.b16 %v712
      %v749 = vunpack.c.l.b16 %v713
      %v750 = vpack.c.b16 %v735, %v734
      %v751 = vpack.c.b16 %v737, %v736
      %v752 = vpack.c.b16 %v739, %v738
      %v753 = vpack.c.b16 %v741, %v740
      %v754 = vpack.c.b16 %v743, %v742
      %v755 = vpack.c.b16 %v745, %v744
      %v756 = vpack.c.b16 %v747, %v746
      %v757 = vpack.c.b16 %v749, %v748
      %766 = vmatpush.bf16.msra.mxu0 %v757
      %767 = vmatpush.bf16.msra.mxu0 %v756
      %768 = vmatpush.bf16.msra.mxu0 %v755
      %769 = vmatpush.bf16.msra.mxu0 %v754
      %770 = vmatpush.bf16.msra.mxu0 %v753
      %771 = vmatpush.bf16.msra.mxu0 %v752
      %772 = vmatpush.bf16.msra.mxu0 %v751
      %773 = vmatpush.bf16.msra.mxu0 %v750
      %774 = vmatmul.bf16.gmra.mxu0 %v690
      %v775 = vpop.f32.mrf.mxu0
      %v776 = vadd.f32 %v716, %v775
      %v777 = vpop.f32.mrf.mxu0
      %v778 = vadd.f32 %v716, %v777
      %779 = vmatmul.bf16.gmra.mxu0 %v691
      %v780 = vpop.f32.mrf.mxu0
      %v781 = vadd.f32 %v716, %v780
      %v782 = vpop.f32.mrf.mxu0
      %v783 = vadd.f32 %v716, %v782
      %784 = vmatmul.bf16.gmra.mxu0 %v692
      %v785 = vpop.f32.mrf.mxu0
      %v786 = vadd.f32 %v716, %v785
      %v787 = vpop.f32.mrf.mxu0
      %v788 = vadd.f32 %v716, %v787
      %789 = vmatmul.bf16.gmra.mxu0 %v693
      %v790 = vpop.f32.mrf.mxu0
      %v791 = vadd.f32 %v716, %v790
      %v792 = vpop.f32.mrf.mxu0
      %v793 = vadd.f32 %v716, %v792
      %794 = vmatmul.bf16.gmra.mxu0 %v694
      %v795 = vpop.f32.mrf.mxu0
      %v796 = vadd.f32 %v716, %v795
      %v797 = vpop.f32.mrf.mxu0
      %v798 = vadd.f32 %v716, %v797
      %799 = vmatmul.bf16.gmra.mxu0 %v695
      %v800 = vpop.f32.mrf.mxu0
      %v801 = vadd.f32 %v716, %v800
      %v802 = vpop.f32.mrf.mxu0
      %v803 = vadd.f32 %v716, %v802
      %804 = vmatmul.bf16.gmra.mxu0 %v696
      %v805 = vpop.f32.mrf.mxu0
      %v806 = vadd.f32 %v716, %v805
      %v807 = vpop.f32.mrf.mxu0
      %v808 = vadd.f32 %v716, %v807
      %809 = vmatmul.bf16.gmra.mxu0 %v697
      %v810 = vpop.f32.mrf.mxu0
      %v811 = vadd.f32 %v716, %v810
      %v812 = vpop.f32.mrf.mxu0
      %v813 = vadd.f32 %v716, %v812
      %814 = vdwg.mxu0
      %v815 = vpack.c.bf16 %v776, %v776
      %v816 = vpack.c.bf16 %v778, %v778
      %v817 = vpack.c.bf16 %v781, %v781
      %v818 = vpack.c.bf16 %v783, %v783
      %v819 = vpack.c.bf16 %v786, %v786
      %v820 = vpack.c.bf16 %v788, %v788
      %v821 = vpack.c.bf16 %v791, %v791
      %v822 = vpack.c.bf16 %v793, %v793
      %v823 = vpack.c.bf16 %v796, %v796
      %v824 = vpack.c.bf16 %v798, %v798
      %v825 = vpack.c.bf16 %v801, %v801
      %v826 = vpack.c.bf16 %v803, %v803
      %v827 = vpack.c.bf16 %v806, %v806
      %v828 = vpack.c.bf16 %v808, %v808
      %v829 = vpack.c.bf16 %v811, %v811
      %v830 = vpack.c.bf16 %v813, %v813
      %831 = vst [vmem:[#allocation9] sm:$0xf] %v815
      %832 = vst [vmem:[#allocation9 + $0x4] sm:$0xf] %v816
      %833 = vst [vmem:[#allocation9 + $0x8] sm:$0xf] %v817
      %834 = vst [vmem:[#allocation9 + $0xc] sm:$0xf] %v818
      %835 = vst [vmem:[#allocation9 + $0x10] sm:$0xf] %v819
      %836 = vst [vmem:[#allocation9 + $0x14] sm:$0xf] %v820
      %837 = vst [vmem:[#allocation9 + $0x18] sm:$0xf] %v821
      %838 = vst [vmem:[#allocation9 + $0x1c] sm:$0xf] %v822
      %839 = vst [vmem:[#allocation9 + $0x20] sm:$0xf] %v823
      %840 = vst [vmem:[#allocation9 + $0x24] sm:$0xf] %v824
      %841 = vst [vmem:[#allocation9 + $0x28] sm:$0xf] %v825
      %842 = vst [vmem:[#allocation9 + $0x2c] sm:$0xf] %v826
      %843 = vst [vmem:[#allocation9 + $0x30] sm:$0xf] %v827
      %844 = vst [vmem:[#allocation9 + $0x34] sm:$0xf] %v828
      %845 = vst [vmem:[#allocation9 + $0x38] sm:$0xf] %v829
      %846 = vst [vmem:[#allocation9 + $0x3c] sm:$0xf] %v830
    $region41: #{tpu_custom_call.1} parent=1 // pred_fallthru
      _
    // Predicated region
    $region42: #{tpu_custom_call.1} parent=1 // pred_check
      _
    $region43: #{tpu_custom_call.1} parent=1 // pred_check_branch
      %848 = sbr.rel (0) target = $region45
    $region44: #{tpu_custom_call.1} parent=1 // pred_region
      %850 = vsyncadd [#allocation5], 0
      %s851 = sshll.u32 [#allocation9], 4
      %s852 = int_to_ptr.vmem [resolvable:$true] %s851
      %s853 = sshll.u32 %s5, 4
      %s854 = int_to_ptr.hbm [resolvable:$true] %s853
      %859 = dma.vmem_to_hbm [thread:$0]  %s852, 1024, %s854, [#allocation5], 64, 64, 4
    $region45: #{tpu_custom_call.1} parent=1 // pred_fallthru
      _
    // Predicated region
    $region46: #{tpu_custom_call.1} parent=1 // pred_check
      _
    $region47: #{tpu_custom_call.1} parent=1 // pred_check_branch
      %861 = sbr.rel (0) target = $region49
    $region48: #{tpu_custom_call.1} parent=1 // pred_region
      %863 = dma.done [#allocation5], 1024
    $region49: #{tpu_custom_call.1} parent=1 // pred_fallthru
      _
    %864 = vsyncpa [#allocation4], 1
    %865 = vsyncpa [#allocation7], 1
    %866 = vsyncpa [#allocation5], 1

</llo_original>
